<compile_context>
chip_gen: v5e
topology: v5e:2x2
jax: 0.10.0
libtpu: 0.0.40
codegen_flags: <defaults>
</compile_context>

<pallas_src>
import functools

import jax
import jax.numpy as jnp
from jax import lax
from jax.experimental import pallas as pl
from jax.experimental.pallas import tpu as pltpu


def _prepost_kernel(seed_ref, x_ref, res_ref, w_ref, b_ref, o_ref,
                    *, keep_threshold, inv_keep_prob, apply_dropout, eps):
    rows, d = x_ref.shape

    # ---- 'n': LayerNorm over d_model (last axis), elementwise affine ----
    x = x_ref[...].astype(jnp.float32)
    mean = jnp.mean(x, axis=-1, keepdims=True)
    mean_sq = jnp.mean(x * x, axis=-1, keepdims=True)
    var = jnp.maximum(mean_sq - mean * mean, 0.0)        # biased var (torch LayerNorm)
    inv = lax.rsqrt(var + eps)

    w = w_ref[...].astype(jnp.float32)
    b = b_ref[...].astype(jnp.float32)
    if apply_dropout:
        # Fold the dropout scale 1/(1-p) into the (1, D) affine params (cheap, per-tile).
        w = w * jnp.float32(inv_keep_prob)
        b = b * jnp.float32(inv_keep_prob)

    y = (x - mean) * inv * w + b

    # ---- 'd': Dropout (train mode). Counter-based hash -> uint32 threshold compare.
    #           Mask depends only on (seed, global_row, col): reproducible across tilings.
    if apply_dropout:
        row0 = pl.program_id(0) * rows
        r = (lax.broadcasted_iota(jnp.int32, (rows, d), 0) + row0).astype(jnp.uint32)
        c = lax.broadcasted_iota(jnp.int32, (rows, d), 1).astype(jnp.uint32)
        h = r * jnp.uint32(0x9E3779B1)
        h = h ^ (c * jnp.uint32(0x85EBCA77))
        h = h ^ seed_ref[0].astype(jnp.uint32)
        # murmur3 finalizer for good bit mixing
        h = h ^ (h >> jnp.uint32(16))
        h = h * jnp.uint32(0x85EBCA6B)
        h = h ^ (h >> jnp.uint32(13))
        h = h * jnp.uint32(0xC2B2AE35)
        h = h ^ (h >> jnp.uint32(16))
        keep = h >= jnp.uint32(keep_threshold)
        y = jnp.where(keep, y, 0.0)

    # ---- 'a': residual add (non-gated residual_type) ----
    y = y + res_ref[...].astype(jnp.float32)
    o_ref[...] = y.astype(o_ref.dtype)


def _pick_row_tile(rows, d, itemsize):
    """Pick a row tile so one block is ~2 MiB (v7x-safe even double-buffered x3 streams)."""
    target_block_bytes = 2 * 1024 * 1024
    tile = max(8, target_block_bytes // max(d * itemsize, 1))
    tile = (tile // 8) * 8                    # sublane multiple
    rows_pad8 = -(-rows // 8) * 8
    tile = min(tile, rows_pad8)
    return max(tile, 8)


def prepost_processing(x, input_tensor, weight, bias, *, dropout_p=0.1,
                       train=True, seed=0, eps=1e-5, row_tile=None):
    """sequence='nda': layer_norm(x) -> dropout -> + input_tensor.

    x, input_tensor: (T, B, D); weight, bias: (D,)
    """
    T, B, D = x.shape
    rows = T * B

    x2 = x.reshape(rows, D)
    r2 = input_tensor.reshape(rows, D)
    w2 = weight.reshape(1, D)
    b2 = bias.reshape(1, D)

    if row_tile is None:
        row_tile = _pick_row_tile(rows, D, x.dtype.itemsize)
    rows_padded = -(-rows // row_tile) * row_tile
    pad = rows_padded - rows
    if pad:
        x2 = jnp.pad(x2, ((0, pad), (0, 0)))
        r2 = jnp.pad(r2, ((0, pad), (0, 0)))

    seed_arr = jnp.asarray([seed], dtype=jnp.int32)
    apply_dropout = bool(train) and float(dropout_p) > 0.0
    keep_threshold = min(int(round(float(dropout_p) * (2 ** 32))), 2 ** 32 - 1)
    inv_keep_prob = 1.0 / (1.0 - float(dropout_p)) if apply_dropout else 1.0

    kernel = functools.partial(
        _prepost_kernel,
        keep_threshold=keep_threshold,
        inv_keep_prob=float(inv_keep_prob),
        apply_dropout=apply_dropout,
        eps=float(eps))

    # 3 streamed arrays x 2 pipeline buffers + f32 intermediates; cap v7x-safe (<48 MiB).
    block_bytes = row_tile * D * x.dtype.itemsize
    vmem_limit = int(min(max(12 * block_bytes, 32 << 20), 48 << 20))

    out2 = pl.pallas_call(
        kernel,
        out_shape=jax.ShapeDtypeStruct((rows_padded, D), x.dtype),
        grid_spec=pltpu.PrefetchScalarGridSpec(
            num_scalar_prefetch=1,                     # seed lands in SMEM
            grid=(rows_padded // row_tile,),
            in_specs=[
                pl.BlockSpec((row_tile, D), lambda i, seed: (i, 0)),  # x
                pl.BlockSpec((row_tile, D), lambda i, seed: (i, 0)),  # residual
                pl.BlockSpec((1, D), lambda i, seed: (0, 0)),         # ln weight
                pl.BlockSpec((1, D), lambda i, seed: (0, 0)),         # ln bias
            ],
            out_specs=pl.BlockSpec((row_tile, D), lambda i, seed: (i, 0)),
        ),
        compiler_params=pltpu.CompilerParams(
            dimension_semantics=("parallel",),         # mask is order-independent -> let
            vmem_limit_bytes=vmem_limit),              # both v7x TCs split the grid
    )(seed_arr, x2, r2, w2, b2)

    if pad:
        out2 = out2[:rows]
    return out2.reshape(T, B, D)


if __name__ == "__main__":
    # Small shapes implied by the module: seq=8, batch=2, d_model=128.
    T, B, D = 8, 2, 128
    dropout_p = 0.1

    key = jax.random.PRNGKey(0)
    k1, k2, k3, k4 = jax.random.split(key, 4)
    x = jax.random.normal(k1, (T, B, D), dtype=jnp.float32)
    residual = jax.random.normal(k2, (T, B, D), dtype=jnp.float32)
    # Deterministic "parameters" for LayerNorm (elementwise_affine=True).
    weight = 1.0 + 0.01 * jax.random.normal(k3, (D,), dtype=jnp.float32)
    bias = 0.01 * jax.random.normal(k4, (D,), dtype=jnp.float32)

    # Correctness check with dropout disabled (eval-mode semantics) vs pure JAX.
    out_eval = prepost_processing(x, residual, weight, bias,
                                  dropout_p=dropout_p, train=False)
    mean = jnp.mean(x, axis=-1, keepdims=True)
    var = jnp.mean((x - mean) ** 2, axis=-1, keepdims=True)
    ref = (x - mean) / jnp.sqrt(var + 1e-5) * weight + bias + residual
    assert jnp.allclose(out_eval, ref, atol=1e-5, rtol=1e-5)

    # Train-mode run (dropout active, deterministic hash-based mask).
    out_train = prepost_processing(x, residual, weight, bias,
                                   dropout_p=dropout_p, train=True, seed=1234)
    jax.block_until_ready(out_train)
    assert bool(jnp.all(jnp.isfinite(out_train)))

    # Sanity: dropout zeros roughly p of the (LayerNorm-ed) elements.
    zeroed = jnp.mean((out_train == residual).astype(jnp.float32))
    assert 0.0 < float(zeroed) < 0.5

    print("KERNEL_OK")
</pallas_src>

<mosaic_0001>
module attributes {stable_mosaic.version = 11 : i64} {
  func.func @_prepost_kernel(%arg0: i32, %arg1: memref<1xi32, #tpu.memory_space<smem>>, %arg2: memref<16x128xf32, #tpu.memory_space<vmem>>, %arg3: memref<16x128xf32, #tpu.memory_space<vmem>>, %arg4: memref<1x128xf32, #tpu.memory_space<vmem>>, %arg5: memref<1x128xf32, #tpu.memory_space<vmem>>, %arg6: memref<16x128xf32, #tpu.memory_space<vmem>>) attributes {dimension_semantics = [#tpu.dimension_semantics<parallel>], iteration_bounds = array<i64: 1>, scalar_prefetch = 1 : i64, scratch_operands = 0 : i64, tpu.core_type = #tpu.core_type<tc>, window_params = [{transform_indices = @transform_0, window_bounds = array<i64: 16, 128>}, {transform_indices = @transform_1, window_bounds = array<i64: 16, 128>}, {pipeline_mode = #tpu.pipeline_mode<synchronous>, transform_indices = @transform_2, window_bounds = array<i64: 1, 128>}, {pipeline_mode = #tpu.pipeline_mode<synchronous>, transform_indices = @transform_3, window_bounds = array<i64: 1, 128>}, {transform_indices = @transform_4, window_bounds = array<i64: 16, 128>}]} {
    %c0 = arith.constant 0 : index
    %c0_0 = arith.constant 0 : index
    %0 = vector.load %arg2[%c0, %c0_0] : memref<16x128xf32, #tpu.memory_space<vmem>>, vector<16x128xf32>
    %cst = arith.constant dense<0.000000e+00> : vector<16xf32>
    %1 = vector.multi_reduction <add>, %0, %cst [1] : vector<16x128xf32> to vector<16xf32>
    %2 = vector.shape_cast %1 : vector<16xf32> to vector<16x1xf32>
    %cst_1 = arith.constant 1.280000e+02 : f32
    %3 = vector.broadcast %cst_1 : f32 to vector<16x1xf32>
    %4 = arith.divf %2, %3 : vector<16x1xf32>
    %5 = arith.mulf %0, %0 : vector<16x128xf32>
    %cst_2 = arith.constant dense<0.000000e+00> : vector<16xf32>
    %6 = vector.multi_reduction <add>, %5, %cst_2 [1] : vector<16x128xf32> to vector<16xf32>
    %7 = vector.shape_cast %6 : vector<16xf32> to vector<16x1xf32>
    %cst_3 = arith.constant 1.280000e+02 : f32
    %8 = vector.broadcast %cst_3 : f32 to vector<16x1xf32>
    %9 = arith.divf %7, %8 : vector<16x1xf32>
    %10 = arith.mulf %4, %4 : vector<16x1xf32>
    %11 = arith.subf %9, %10 : vector<16x1xf32>
    %cst_4 = arith.constant 0.000000e+00 : f32
    %12 = vector.broadcast %cst_4 : f32 to vector<16x1xf32>
    %13 = arith.maximumf %11, %12 : vector<16x1xf32>
    %cst_5 = arith.constant 9.99999974E-6 : f32
    %14 = vector.broadcast %cst_5 : f32 to vector<16x1xf32>
    %15 = arith.addf %13, %14 : vector<16x1xf32>
    %16 = math.rsqrt %15 : vector<16x1xf32>
    %c0_6 = arith.constant 0 : index
    %c0_7 = arith.constant 0 : index
    %17 = vector.load %arg4[%c0_6, %c0_7] : memref<1x128xf32, #tpu.memory_space<vmem>>, vector<1x128xf32>
    %c0_8 = arith.constant 0 : index
    %c0_9 = arith.constant 0 : index
    %18 = vector.load %arg5[%c0_8, %c0_9] : memref<1x128xf32, #tpu.memory_space<vmem>>, vector<1x128xf32>
    %19 = vector.broadcast %4 : vector<16x1xf32> to vector<16x128xf32>
    %20 = arith.subf %0, %19 : vector<16x128xf32>
    %21 = vector.broadcast %16 : vector<16x1xf32> to vector<16x128xf32>
    %22 = arith.mulf %20, %21 : vector<16x128xf32>
    %23 = vector.broadcast %17 : vector<1x128xf32> to vector<16x128xf32>
    %24 = arith.mulf %22, %23 : vector<16x128xf32>
    %25 = vector.broadcast %18 : vector<1x128xf32> to vector<16x128xf32>
    %26 = arith.addf %24, %25 : vector<16x128xf32>
    %c0_10 = arith.constant 0 : index
    %c0_11 = arith.constant 0 : index
    %27 = vector.load %arg3[%c0_10, %c0_11] : memref<16x128xf32, #tpu.memory_space<vmem>>, vector<16x128xf32>
    %28 = arith.addf %26, %27 : vector<16x128xf32>
    %c0_12 = arith.constant 0 : index
    %c0_13 = arith.constant 0 : index
    %29 = vector.load %arg6[%c0_12, %c0_13] : memref<16x128xf32, #tpu.memory_space<vmem>>, vector<16x128xf32>
    tpu.vector_store %arg6[%c0_12, %c0_13], %28 {strides = array<i32>} : memref<16x128xf32, #tpu.memory_space<vmem>>, vector<16x128xf32>,
    return
  }
  func.func @transform_0(%arg0: i32, %arg1: memref<1xi32, #tpu.memory_space<smem>>) -> (i32, i32) {
    %c0_i32 = arith.constant 0 : i32
    %c0_i32_0 = arith.constant 0 : i32
    return %arg0, %c0_i32 : i32, i32
  }
  func.func @transform_1(%arg0: i32, %arg1: memref<1xi32, #tpu.memory_space<smem>>) -> (i32, i32) {
    %c0_i32 = arith.constant 0 : i32
    %c0_i32_0 = arith.constant 0 : i32
    return %arg0, %c0_i32 : i32, i32
  }
  func.func @transform_2(%arg0: i32, %arg1: memref<1xi32, #tpu.memory_space<smem>>) -> (i32, i32) {
    %c0_i32 = arith.constant 0 : i32
    %c0_i32_0 = arith.constant 0 : i32
    %c0_i32_1 = arith.constant 0 : i32
    return %c0_i32, %c0_i32_0 : i32, i32
  }
  func.func @transform_3(%arg0: i32, %arg1: memref<1xi32, #tpu.memory_space<smem>>) -> (i32, i32) {
    %c0_i32 = arith.constant 0 : i32
    %c0_i32_0 = arith.constant 0 : i32
    %c0_i32_1 = arith.constant 0 : i32
    return %c0_i32, %c0_i32_0 : i32, i32
  }
  func.func @transform_4(%arg0: i32, %arg1: memref<1xi32, #tpu.memory_space<smem>>) -> (i32, i32) {
    %c0_i32 = arith.constant 0 : i32
    %c0_i32_0 = arith.constant 0 : i32
    return %arg0, %c0_i32 : i32, i32
  }
}

</mosaic_0001>

<llo_original>
// kernel: tpu_custom_call.1
$region0: #{tpu_custom_call.1}
  #allocation0 [shape = 'u32[]', space=smem, size = 0x4, offset = 0x4, fixed_abs, tag = 'smem constant byte address 0x4 - core index']
  #allocation1 [shape = 'u32[72,128]{1,0:T(1,128)}', space=vmem, size = 0x9000, scoped, tag = 'internal scratch']
  #allocation2 [shape = 's32[1]{0}', space=sflag, size = 0x4, scoped, tag = 'scoped memory for tpu_custom_call.1']
  #allocation3 [shape = 's32[1]{0:T(128)S(6)}', space=smem, size = 0x200, scoped, tag = 'prefetched SMEM operand 0']
  %s0 = inlined_call_operand.<no memory space> [shape: s32[1], index: 0, kind: input, shape index: {}]
  %s1 = inlined_call_operand.hbm [shape: f32[16,128], index: 1, kind: input, shape index: {}]
  %s2 = inlined_call_operand.hbm [shape: f32[16,128], index: 2, kind: input, shape index: {}]
  %s3 = inlined_call_operand.vmem [shape: f32[1,128], index: 3, kind: input, shape index: {}]
  %s4 = inlined_call_operand.vmem [shape: f32[1,128], index: 4, kind: input, shape index: {}]
  %s5 = inlined_call_operand.hbm [shape: f32[16,128], index: 5, kind: output, shape index: {}]
  %s6 = sld [smem:[#allocation0]]
  $region34: #{tpu_custom_call.1} parent=0
    _
  %s8 = ssub.s32 1, %s6
  %s9 = scalar_select 0, %s8, %s6
  %10 = sst [smem:[#allocation3]] %s0
  $region1: #{tpu_custom_call.1} parent=0
    #allocation4 [shape = 'u8[8192]{0}', space=vmem, size = 0x2000, scoped, tag = 'input window, operand 1, single buffered']
    #allocation5 [shape = 's32[1]{0}', space=sflag, size = 0x4, scoped, tag = 'scoped memory for tpu_custom_call.1']
    #allocation6 [shape = 's32[1]{0}', space=sflag, size = 0x4, scoped, tag = 'scoped memory for tpu_custom_call.1']
    #allocation7 [shape = 'u8[8192]{0}', space=vmem, size = 0x2000, scoped, tag = 'input window, operand 2, single buffered']
    #allocation8 [shape = 's32[1]{0}', space=sflag, size = 0x4, scoped, tag = 'scoped memory for tpu_custom_call.1']
    #allocation9 [shape = 'u8[8192]{0}', space=vmem, size = 0x2000, scoped, tag = 'output window, operand 0, single buffered']
    %11 = vsyncpa [#allocation5], 0
    %12 = vsyncpa [#allocation8], 0
    %13 = vsyncpa [#allocation6], 0
    // Predicated region
    $region2: #{tpu_custom_call.1} parent=1 // pred_check
      _
    $region3: #{tpu_custom_call.1} parent=1 // pred_check_branch
      %15 = sbr.rel (0) target = $region5
    $region4: #{tpu_custom_call.1} parent=1 // pred_region
      %17 = vsyncadd [#allocation5], 0
      %s18 = sshll.u32 %s1, 4
      %s19 = int_to_ptr.hbm [resolvable:$true] %s18
      %s20 = sshll.u32 [#allocation4], 4
      %s21 = int_to_ptr.vmem [resolvable:$true] %s20
      %26 = dma.hbm_to_vmem [thread:$0]  %s19, 256, %s21, [#allocation5], 128, 128, 8
    $region5: #{tpu_custom_call.1} parent=1 // pred_fallthru
      _
    // Predicated region
    $region6: #{tpu_custom_call.1} parent=1 // pred_check
      _
    $region7: #{tpu_custom_call.1} parent=1 // pred_check_branch
      %28 = sbr.rel (0) target = $region9
    $region8: #{tpu_custom_call.1} parent=1 // pred_region
      %30 = vsyncadd [#allocation8], 0
      %s31 = sshll.u32 %s2, 4
      %s32 = int_to_ptr.hbm [resolvable:$true] %s31
      %s33 = sshll.u32 [#allocation7], 4
      %s34 = int_to_ptr.vmem [resolvable:$true] %s33
      %39 = dma.hbm_to_vmem [thread:$0]  %s32, 256, %s34, [#allocation8], 128, 128, 8
    $region9: #{tpu_custom_call.1} parent=1 // pred_fallthru
      _
    // Predicated region
    $region10: #{tpu_custom_call.1} parent=1 // pred_check
      _
    $region11: #{tpu_custom_call.1} parent=1 // pred_check_branch
      %41 = sbr.rel (0) target = $region13
    $region12: #{tpu_custom_call.1} parent=1 // pred_region
      _
    $region13: #{tpu_custom_call.1} parent=1 // pred_fallthru
      _
    // Predicated region
    $region14: #{tpu_custom_call.1} parent=1 // pred_check
      _
    $region15: #{tpu_custom_call.1} parent=1 // pred_check_branch
      %43 = sbr.rel (0) target = $region17
    $region16: #{tpu_custom_call.1} parent=1 // pred_region
      _
    $region17: #{tpu_custom_call.1} parent=1 // pred_fallthru
      _
    // Predicated region
    $region18: #{tpu_custom_call.1} parent=1 // pred_check
      _
    $region19: #{tpu_custom_call.1} parent=1 // pred_check_branch
      %45 = sbr.rel (0) target = $region21
    $region20: #{tpu_custom_call.1} parent=1 // pred_region
      %47 = dma.done [#allocation5], 256
    $region21: #{tpu_custom_call.1} parent=1 // pred_fallthru
      _
    // Predicated region
    $region22: #{tpu_custom_call.1} parent=1 // pred_check
      _
    $region23: #{tpu_custom_call.1} parent=1 // pred_check_branch
      %49 = sbr.rel (0) target = $region25
    $region24: #{tpu_custom_call.1} parent=1 // pred_region
      %51 = dma.done [#allocation8], 256
    $region25: #{tpu_custom_call.1} parent=1 // pred_fallthru
      _
    %v52 = vld [vmem:[#allocation4] sm:$0xff]
    %v53 = vld [vmem:[#allocation4 + $0x8] sm:$0xff]
    %54 = vadd.xlane.f32.xlu0 %v52
    %v55 = vpop.xlane.xlu0 %54
    %56 = vadd.xlane.f32.xlu0 %v53
    %v57 = vpop.xlane.xlu0 %56
    %v58 = vrcp.pop 128.0
    %v59 = vmul.f32 128.0, %v58
    %v60 = vsub.f32 1.0, %v59
    %v61 = vmul.f32 %v58, %v60
    %v62 = vadd.f32 %v58, %v61
    %vm63 = vweird.f32 %v58
    %v64 = vsel %vm63, %v58, %v62
    %v65 = vmul.f32 %v55, %v64
    %v66 = vmul.f32 %v57, %v64
    %v67 = vmul.f32 %v52, %v52
    %v68 = vmul.f32 %v53, %v53
    %69 = vadd.xlane.f32.xlu0 %v67
    %v70 = vpop.xlane.xlu0 %69
    %71 = vadd.xlane.f32.xlu0 %v68
    %v72 = vpop.xlane.xlu0 %71
    %v73 = vmul.f32 %v70, %v64
    %v74 = vmul.f32 %v72, %v64
    %v75 = vmul.f32 %v65, %v65
    %v76 = vmul.f32 %v66, %v66
    %v77 = vsub.f32 %v73, %v75
    %v78 = vsub.f32 %v74, %v76
    %v79 = vmax.f32 %v77, 0.0
    %v80 = vmax.f32 %v78, 0.0
    %v81 = vadd.f32 %v79, 1e-05
    %v82 = vadd.f32 %v80, 1e-05
    %v83 = vrsqrt.pop %v81
    %v84 = vmul.f32 %v83, %v81
    %v85 = vmul.f32 %v84, %v83
    %v86 = vmul.f32 0.5, %v85
    %v87 = vsub.f32 1.5, %v86
    %v88 = vmul.f32 %v83, %v87
    %vm89 = vweird.f32 %v81
    %vm90 = vweird.f32 %v83
    %vm91 = vmor %vm89, %vm90
    %v92 = vsel %vm91, %v83, %v88
    %v93 = vrsqrt.pop %v82
    %v94 = vmul.f32 %v93, %v82
    %v95 = vmul.f32 %v94, %v93
    %v96 = vmul.f32 0.5, %v95
    %v97 = vsub.f32 1.5, %v96
    %v98 = vmul.f32 %v93, %v97
    %vm99 = vweird.f32 %v82
    %vm100 = vweird.f32 %v93
    %vm101 = vmor %vm99, %vm100
    %v102 = vsel %vm101, %v93, %v98
    %v103 = vld [vmem:[%s3] sm:$0x1]
    %v104 = vld [vmem:[%s4] sm:$0x1]
    %v105 = vsub.f32 %v52, %v65
    %v106 = vsub.f32 %v53, %v66
    %v107 = vmul.f32 %v105, %v92
    %v108 = vmul.f32 %v106, %v102
    %v110 = vperm.slane %v103, 0
    %v112 = vmul.f32 %v107, %v110
    %v113 = vmul.f32 %v108, %v110
    %v115 = vperm.slane %v104, 0
    %v117 = vadd.f32 %v112, %v115
    %v118 = vadd.f32 %v113, %v115
    %v119 = vld [vmem:[#allocation7] sm:$0xff]
    %v120 = vld [vmem:[#allocation7 + $0x8] sm:$0xff]
    %v121 = vadd.f32 %v117, %v119
    %v122 = vadd.f32 %v118, %v120
    %123 = vst [vmem:[#allocation9] sm:$0xff] %v121
    %124 = vst [vmem:[#allocation9 + $0x8] sm:$0xff] %v122
    // Predicated region
    $region26: #{tpu_custom_call.1} parent=1 // pred_check
      _
    $region27: #{tpu_custom_call.1} parent=1 // pred_check_branch
      %126 = sbr.rel (0) target = $region29
    $region28: #{tpu_custom_call.1} parent=1 // pred_region
      %128 = vsyncadd [#allocation6], 0
      %s129 = sshll.u32 [#allocation9], 4
      %s130 = int_to_ptr.vmem [resolvable:$true] %s129
      %s131 = sshll.u32 %s5, 4
      %s132 = int_to_ptr.hbm [resolvable:$true] %s131
      %137 = dma.vmem_to_hbm [thread:$0]  %s130, 256, %s132, [#allocation6], 128, 128, 8
    $region29: #{tpu_custom_call.1} parent=1 // pred_fallthru
      _
    // Predicated region
    $region30: #{tpu_custom_call.1} parent=1 // pred_check
      _
    $region31: #{tpu_custom_call.1} parent=1 // pred_check_branch
      %139 = sbr.rel (0) target = $region33
    $region32: #{tpu_custom_call.1} parent=1 // pred_region
      %141 = dma.done [#allocation6], 256
    $region33: #{tpu_custom_call.1} parent=1 // pred_fallthru
      _
    %142 = vsyncpa [#allocation5], 1
    %143 = vsyncpa [#allocation8], 1
    %144 = vsyncpa [#allocation6], 1

</llo_original>
